<compile_context>
chip_gen: v5e
topology: v5e:2x2
jax: 0.10.0
libtpu: 0.0.40
codegen_flags: <defaults>
</compile_context>

<pallas_src>
import jax
import jax.numpy as jnp
import numpy as np
from jax.experimental import pallas as pl
from jax.experimental.pallas import tpu as pltpu


# ----------------------------------------------------------------------------
# Fused Pallas kernel: maxpool(2) + (conv3x3 -> BN -> ReLU) x 2
# ----------------------------------------------------------------------------
def _down_fused_kernel(x_ref, w1_ref, b1_ref, w2_ref, b2_ref,
                       out_ref, pad1_ref, pad2_ref):
    """Fused MaxPool2d(2) + DoubleConv for one batch element.

    x_ref   : (1, H2, 2, W2, 2*Cin) f32 - input reshaped (free row-major reshape in
              the wrapper) so the 2x2 pooling window is explicit.
    w1_ref  : (9*Cin,  Cmid) bf16 - conv1 weights with BN1 scale folded in,
              taps flattened as (dy, dx, cin).
    b1_ref  : (1, Cmid) f32 - folded BatchNorm shift for conv1.
    w2_ref  : (9*Cmid, Cout) bf16 - conv2 weights with BN2 scale folded in.
    b2_ref  : (1, Cout) f32 - folded BatchNorm shift for conv2.
    out_ref : (1, H2, W2, Cout) f32
    pad1_ref: (H2+2, W2+2, Cin)  f32 VMEM scratch (zero-padded pooled input)
    pad2_ref: (H2+2, W2+2, Cmid) f32 VMEM scratch (zero-padded conv1 output)
    """
    _, H2, W2, Cout = out_ref.shape
    Cin = pad1_ref.shape[-1]
    Cmid = pad2_ref.shape[-1]
    mxu_dtype = w1_ref.dtype

    def conv3x3_bias_relu(pad_ref, interior, w_ref, b_ref):
        # Halo handled in VMEM: zero the padded scratch, write the interior, then
        # build the im2col matrix and do ONE MXU matmul + f32 bias/ReLU epilogue.
        c = pad_ref.shape[-1]
        pad_ref[...] = jnp.zeros_like(pad_ref)
        pad_ref[1:H2 + 1, 1:W2 + 1, :] = interior
        xp = pad_ref[...]                                        # (H2+2, W2+2, c)
        taps = [xp[dy:dy + H2, dx:dx + W2, :]
                for dy in range(3) for dx in range(3)]           # 9 x (H2, W2, c)
        col = jnp.concatenate(taps, axis=-1).reshape(H2 * W2, 9 * c)
        acc = jnp.dot(col.astype(mxu_dtype), w_ref[...],
                      preferred_element_type=jnp.float32)        # (H2*W2, n) f32
        return jnp.maximum(acc + b_ref[...], 0.0)

    # ---- fused 2x2 max-pool (VPU; no HBM round-trip, no extra pallas_call) ----
    hmax = jnp.maximum(x_ref[0, :, 0, :, :], x_ref[0, :, 1, :, :])  # (H2, W2, 2*Cin)
    pooled = jnp.maximum(hmax[:, :, :Cin], hmax[:, :, Cin:])        # (H2, W2, Cin)

    # ---- DoubleConv (BN scale pre-folded into weights) ----
    y = conv3x3_bias_relu(pad1_ref, pooled, w1_ref, b1_ref)         # (H2*W2, Cmid)
    # TODO(synk): nn.Dropout(p=0.2) is stochastic only in training; identity in
    # eval/inference mode, so it is omitted here.
    z = conv3x3_bias_relu(pad2_ref, y.reshape(H2, W2, Cmid),
                          w2_ref, b2_ref)                           # (H2*W2, Cout)

    out_ref[0] = z.reshape(H2, W2, Cout)        # single large store per grid step


# ----------------------------------------------------------------------------
# Wrapper
# ----------------------------------------------------------------------------
def down_forward(x_nchw, params, *, mxu_dtype=jnp.bfloat16):
    """Pallas equivalent of Down(in_channels, out_channels).forward (eval mode)."""
    x = jnp.transpose(x_nchw, (0, 2, 3, 1)).astype(jnp.float32)     # NCHW -> NHWC
    N, H, W, Cin = x.shape
    assert H % 2 == 0 and W % 2 == 0, "MaxPool2d(2) needs even spatial dims"
    H2, W2 = H // 2, W // 2
    # Free (contiguous, row-major) reshape exposing the 2x2 pool window:
    #   (N, H, W, C) -> (N, H2, 2, W2, 2*C)   (no data movement)
    x5 = x.reshape(N, H2, 2, W2, 2 * Cin)

    w1 = params["w1"]                                               # (3,3,Cin,Cmid)
    w2 = params["w2"]                                               # (3,3,Cmid,Cout)
    Cmid, Cout = w1.shape[-1], w2.shape[-1]
    # Fold the BN scale into the weights (f32), then cast to the MXU dtype once.
    w1f = (w1 * params["s1"].reshape(1, 1, 1, Cmid)
           ).reshape(9 * Cin, Cmid).astype(mxu_dtype)
    w2f = (w2 * params["s2"].reshape(1, 1, 1, Cout)
           ).reshape(9 * Cmid, Cout).astype(mxu_dtype)
    b1 = params["b1"].reshape(1, Cmid).astype(jnp.float32)
    b2 = params["b2"].reshape(1, Cout).astype(jnp.float32)

    # NOTE: at 16x16 a whole image (plus halo) easily fits in VMEM; for production
    # resolutions this kernel would tile row-bands with a 1-row halo instead of
    # whole images (and set vmem_limit_bytes for v7x's 64 MiB VMEM).
    out_nhwc = pl.pallas_call(
        _down_fused_kernel,
        out_shape=jax.ShapeDtypeStruct((N, H2, W2, Cout), jnp.float32),
        grid=(N,),
        in_specs=[
            pl.BlockSpec((1, H2, 2, W2, 2 * Cin), lambda n: (n, 0, 0, 0, 0)),
            pl.BlockSpec((9 * Cin, Cmid), lambda n: (0, 0)),
            pl.BlockSpec((1, Cmid), lambda n: (0, 0)),
            pl.BlockSpec((9 * Cmid, Cout), lambda n: (0, 0)),
            pl.BlockSpec((1, Cout), lambda n: (0, 0)),
        ],
        out_specs=pl.BlockSpec((1, H2, W2, Cout), lambda n: (n, 0, 0, 0)),
        scratch_shapes=[
            pltpu.VMEM((H2 + 2, W2 + 2, Cin), jnp.float32),
            pltpu.VMEM((H2 + 2, W2 + 2, Cmid), jnp.float32),
        ],
        compiler_params=pltpu.CompilerParams(
            dimension_semantics=("parallel",)),   # N=2 parallel points -> both v7x TCs
    )(x5, w1f, b1, w2f, b2)
    return jnp.transpose(out_nhwc, (0, 3, 1, 2))                    # NHWC -> NCHW


# ----------------------------------------------------------------------------
# Pure-JAX reference (PyTorch eval-mode semantics) for correctness checking
# ----------------------------------------------------------------------------
def down_reference(x_nchw, params, *, quantize_to=None):
    """quantize_to=jnp.bfloat16 rounds the matmul operands exactly like the kernel
    does (scale folded into the weights before rounding), isolating structural
    errors from the intended bf16 quantization."""
    def q(a):
        return a.astype(quantize_to).astype(jnp.float32)

    x = jnp.transpose(x_nchw, (0, 2, 3, 1)).astype(jnp.float32)
    N, H, W, C = x.shape
    h = x.reshape(N, H // 2, 2, W // 2, 2, C).max(axis=(2, 4))      # MaxPool2d(2)

    def conv(a, w):
        return jax.lax.conv_general_dilated(
            a, w, window_strides=(1, 1), padding="SAME",
            dimension_numbers=("NHWC", "HWIO", "NHWC"),
            precision=jax.lax.Precision.HIGHEST)

    def conv_bn_relu(h, w, s, b):
        if quantize_to is not None:
            y = conv(q(h), q(w * s)) + b            # mirrors the kernel exactly
        else:
            y = conv(h, w) * s + b                  # PyTorch eval-mode semantics
        return jnp.maximum(y, 0.0)

    h = conv_bn_relu(h, params["w1"], params["s1"], params["b1"])
    h = conv_bn_relu(h, params["w2"], params["s2"], params["b2"])
    return jnp.transpose(h, (0, 3, 1, 2))


# ----------------------------------------------------------------------------
# Deterministic synthetic parameters (shapes match the PyTorch module)
# ----------------------------------------------------------------------------
def _init_bn_affine(key, c):
    k1, k2, k3, k4 = jax.random.split(key, 4)
    gamma = 1.0 + 0.1 * jax.random.normal(k1, (c,), jnp.float32)
    beta = 0.1 * jax.random.normal(k2, (c,), jnp.float32)
    rmean = 0.1 * jax.random.normal(k3, (c,), jnp.float32)
    rvar = 0.5 + jax.random.uniform(k4, (c,), jnp.float32)
    scale = gamma / jnp.sqrt(rvar + 1e-5)
    shift = beta - rmean * scale
    return scale, shift


def init_down_params(key, in_channels, out_channels, mid_channels=None):
    mid = mid_channels if mid_channels is not None else out_channels
    k = jax.random.split(key, 4)
    w1 = jax.random.normal(k[0], (3, 3, in_channels, mid), jnp.float32) \
        / np.sqrt(9.0 * in_channels)
    s1, b1 = _init_bn_affine(k[1], mid)
    w2 = jax.random.normal(k[2], (3, 3, mid, out_channels), jnp.float32) \
        / np.sqrt(9.0 * mid)
    s2, b2 = _init_bn_affine(k[3], out_channels)
    return dict(w1=w1, s1=s1, b1=b1, w2=w2, s2=s2, b2=b2)


# ----------------------------------------------------------------------------
if __name__ == "__main__":
    key = jax.random.PRNGKey(0)
    kx, kp = jax.random.split(key)

    N, Cin, H, W = 2, 4, 16, 16          # Down(in_channels=4, out_channels=8)
    Cout = 8
    x = jax.random.normal(kx, (N, Cin, H, W), jnp.float32)           # NCHW
    params = init_down_params(kp, Cin, Cout)

    fwd = jax.jit(lambda xx: down_forward(xx, params))
    out = jax.block_until_ready(fwd(x))

    assert out.shape == (N, Cout, H // 2, W // 2), out.shape
    assert bool(jnp.all(jnp.isfinite(out)))

    # Tight check vs a reference that rounds matmul operands to bf16 like the kernel.
    ref_q = down_reference(x, params, quantize_to=jnp.bfloat16)
    err_q = float(jnp.max(jnp.abs(out - ref_q)))
    assert err_q < 5e-3, f"kernel vs bf16-rounded reference: max abs err {err_q}"

    # Loose check vs the full-f32 PyTorch-equivalent reference (bf16 rounding only).
    ref = down_reference(x, params)
    err = float(jnp.max(jnp.abs(out - ref)))
    assert err < 2e-1, f"kernel vs f32 reference: max abs err {err}"

    print("KERNEL_OK")
</pallas_src>

<mosaic_0001>
module attributes {stable_mosaic.version = 11 : i64} {
  func.func @_down_fused_kernel(%arg0: i32, %arg1: memref<1x8x2x8x8xf32, #tpu.memory_space<vmem>>, %arg2: memref<36x8xbf16, #tpu.memory_space<vmem>>, %arg3: memref<1x8xf32, #tpu.memory_space<vmem>>, %arg4: memref<72x8xbf16, #tpu.memory_space<vmem>>, %arg5: memref<1x8xf32, #tpu.memory_space<vmem>>, %arg6: memref<1x8x8x8xf32, #tpu.memory_space<vmem>>, %arg7: memref<10x10x4xf32, #tpu.memory_space<vmem>>, %arg8: memref<10x10x8xf32, #tpu.memory_space<vmem>>) attributes {dimension_semantics = [#tpu.dimension_semantics<parallel>], iteration_bounds = array<i64: 2>, scalar_prefetch = 0 : i64, scratch_operands = 2 : i64, tpu.core_type = #tpu.core_type<tc>, window_params = [{transform_indices = @transform_0, window_bounds = array<i64: 1, 8, 2, 8, 8>}, {pipeline_mode = #tpu.pipeline_mode<synchronous>, transform_indices = @transform_1, window_bounds = array<i64: 36, 8>}, {pipeline_mode = #tpu.pipeline_mode<synchronous>, transform_indices = @transform_2, window_bounds = array<i64: 1, 8>}, {pipeline_mode = #tpu.pipeline_mode<synchronous>, transform_indices = @transform_3, window_bounds = array<i64: 72, 8>}, {pipeline_mode = #tpu.pipeline_mode<synchronous>, transform_indices = @transform_4, window_bounds = array<i64: 1, 8>}, {transform_indices = @transform_5, window_bounds = array<i64: 1, 8, 8, 8>}]} {
    %c0 = arith.constant 0 : index
    %c0_0 = arith.constant 0 : index
    %c0_1 = arith.constant 0 : index
    %c0_2 = arith.constant 0 : index
    %c0_3 = arith.constant 0 : index
    %0 = vector.load %arg1[%c0, %c0_0, %c0_1, %c0_2, %c0_3] : memref<1x8x2x8x8xf32, #tpu.memory_space<vmem>>, vector<1x8x1x8x8xf32>
    %1 = vector.shape_cast %0 : vector<1x8x1x8x8xf32> to vector<8x8x8xf32>
    %c0_4 = arith.constant 0 : index
    %c0_5 = arith.constant 0 : index
    %c1 = arith.constant 1 : index
    %c0_6 = arith.constant 0 : index
    %c0_7 = arith.constant 0 : index
    %2 = vector.load %arg1[%c0_4, %c0_5, %c1, %c0_6, %c0_7] : memref<1x8x2x8x8xf32, #tpu.memory_space<vmem>>, vector<1x8x1x8x8xf32>
    %3 = vector.shape_cast %2 : vector<1x8x1x8x8xf32> to vector<8x8x8xf32>
    %4 = arith.maximumf %1, %3 : vector<8x8x8xf32>
    %5 = vector.extract_strided_slice %4 {offsets = [0, 0, 0], sizes = [8, 8, 4], strides = [1, 1, 1]} : vector<8x8x8xf32> to vector<8x8x4xf32>
    %6 = vector.extract_strided_slice %4 {offsets = [0, 0, 4], sizes = [8, 8, 4], strides = [1, 1, 1]} : vector<8x8x8xf32> to vector<8x8x4xf32>
    %7 = arith.maximumf %5, %6 : vector<8x8x4xf32>
    %cst = arith.constant 0.000000e+00 : f32
    %8 = vector.broadcast %cst : f32 to vector<10x10x4xf32>
    %c0_8 = arith.constant 0 : index
    %c0_9 = arith.constant 0 : index
    %c0_10 = arith.constant 0 : index
    %9 = vector.load %arg7[%c0_8, %c0_9, %c0_10] : memref<10x10x4xf32, #tpu.memory_space<vmem>>, vector<10x10x4xf32>
    tpu.vector_store %arg7[%c0_8, %c0_9, %c0_10], %8 {strides = array<i32>} : memref<10x10x4xf32, #tpu.memory_space<vmem>>, vector<10x10x4xf32>,
    %c1_11 = arith.constant 1 : index
    %c1_12 = arith.constant 1 : index
    %c0_13 = arith.constant 0 : index
    %10 = vector.load %arg7[%c1_11, %c1_12, %c0_13] : memref<10x10x4xf32, #tpu.memory_space<vmem>>, vector<8x8x4xf32>
    tpu.vector_store %arg7[%c1_11, %c1_12, %c0_13], %7 {strides = array<i32>} : memref<10x10x4xf32, #tpu.memory_space<vmem>>, vector<8x8x4xf32>,
    %c0_14 = arith.constant 0 : index
    %c0_15 = arith.constant 0 : index
    %c0_16 = arith.constant 0 : index
    %11 = vector.load %arg7[%c0_14, %c0_15, %c0_16] : memref<10x10x4xf32, #tpu.memory_space<vmem>>, vector<10x10x4xf32>
    %12 = vector.extract_strided_slice %11 {offsets = [0, 0, 0], sizes = [8, 8, 4], strides = [1, 1, 1]} : vector<10x10x4xf32> to vector<8x8x4xf32>
    %13 = vector.extract_strided_slice %11 {offsets = [0, 1, 0], sizes = [8, 8, 4], strides = [1, 1, 1]} : vector<10x10x4xf32> to vector<8x8x4xf32>
    %14 = vector.extract_strided_slice %11 {offsets = [0, 2, 0], sizes = [8, 8, 4], strides = [1, 1, 1]} : vector<10x10x4xf32> to vector<8x8x4xf32>
    %15 = vector.extract_strided_slice %11 {offsets = [1, 0, 0], sizes = [8, 8, 4], strides = [1, 1, 1]} : vector<10x10x4xf32> to vector<8x8x4xf32>
    %16 = vector.extract_strided_slice %11 {offsets = [1, 1, 0], sizes = [8, 8, 4], strides = [1, 1, 1]} : vector<10x10x4xf32> to vector<8x8x4xf32>
    %17 = vector.extract_strided_slice %11 {offsets = [1, 2, 0], sizes = [8, 8, 4], strides = [1, 1, 1]} : vector<10x10x4xf32> to vector<8x8x4xf32>
    %18 = vector.extract_strided_slice %11 {offsets = [2, 0, 0], sizes = [8, 8, 4], strides = [1, 1, 1]} : vector<10x10x4xf32> to vector<8x8x4xf32>
    %19 = vector.extract_strided_slice %11 {offsets = [2, 1, 0], sizes = [8, 8, 4], strides = [1, 1, 1]} : vector<10x10x4xf32> to vector<8x8x4xf32>
    %20 = vector.extract_strided_slice %11 {offsets = [2, 2, 0], sizes = [8, 8, 4], strides = [1, 1, 1]} : vector<10x10x4xf32> to vector<8x8x4xf32>
    %21 = tpu.concatenate %12, %13, %14, %15, %16, %17, %18, %19, %20 in 2 : vector<8x8x4xf32>, vector<8x8x4xf32>, vector<8x8x4xf32>, vector<8x8x4xf32>, vector<8x8x4xf32>, vector<8x8x4xf32>, vector<8x8x4xf32>, vector<8x8x4xf32>, vector<8x8x4xf32> -> vector<8x8x36xf32>
    %22 = vector.shape_cast %21 : vector<8x8x36xf32> to vector<64x36xf32>
    %23 = arith.truncf %22 : vector<64x36xf32> to vector<64x36xbf16>
    %c0_17 = arith.constant 0 : index
    %c0_18 = arith.constant 0 : index
    %24 = vector.load %arg2[%c0_17, %c0_18] : memref<36x8xbf16, #tpu.memory_space<vmem>>, vector<36x8xbf16>
    %cst_19 = arith.constant dense<0.000000e+00> : vector<64x8xf32>
    %25 = tpu.matmul %23, %24, %cst_19 {dimension_numbers = #tpu.dot_dimension_numbers<[1], [0], [0], [1], [0, 0, 1, 1], [], []>} : vector<64x36xbf16>, vector<36x8xbf16>, vector<64x8xf32> -> vector<64x8xf32>
    %c0_20 = arith.constant 0 : index
    %c0_21 = arith.constant 0 : index
    %26 = vector.load %arg3[%c0_20, %c0_21] : memref<1x8xf32, #tpu.memory_space<vmem>>, vector<1x8xf32>
    %27 = vector.broadcast %26 : vector<1x8xf32> to vector<64x8xf32>
    %28 = arith.addf %25, %27 : vector<64x8xf32>
    %cst_22 = arith.constant 0.000000e+00 : f32
    %29 = vector.broadcast %cst_22 : f32 to vector<64x8xf32>
    %30 = arith.maximumf %28, %29 : vector<64x8xf32>
    %31 = vector.shape_cast %30 : vector<64x8xf32> to vector<8x8x8xf32>
    %cst_23 = arith.constant 0.000000e+00 : f32
    %32 = vector.broadcast %cst_23 : f32 to vector<10x10x8xf32>
    %c0_24 = arith.constant 0 : index
    %c0_25 = arith.constant 0 : index
    %c0_26 = arith.constant 0 : index
    %33 = vector.load %arg8[%c0_24, %c0_25, %c0_26] : memref<10x10x8xf32, #tpu.memory_space<vmem>>, vector<10x10x8xf32>
    tpu.vector_store %arg8[%c0_24, %c0_25, %c0_26], %32 {strides = array<i32>} : memref<10x10x8xf32, #tpu.memory_space<vmem>>, vector<10x10x8xf32>,
    %c1_27 = arith.constant 1 : index
    %c1_28 = arith.constant 1 : index
    %c0_29 = arith.constant 0 : index
    %34 = vector.load %arg8[%c1_27, %c1_28, %c0_29] : memref<10x10x8xf32, #tpu.memory_space<vmem>>, vector<8x8x8xf32>
    tpu.vector_store %arg8[%c1_27, %c1_28, %c0_29], %31 {strides = array<i32>} : memref<10x10x8xf32, #tpu.memory_space<vmem>>, vector<8x8x8xf32>,
    %c0_30 = arith.constant 0 : index
    %c0_31 = arith.constant 0 : index
    %c0_32 = arith.constant 0 : index
    %35 = vector.load %arg8[%c0_30, %c0_31, %c0_32] : memref<10x10x8xf32, #tpu.memory_space<vmem>>, vector<10x10x8xf32>
    %36 = vector.extract_strided_slice %35 {offsets = [0, 0, 0], sizes = [8, 8, 8], strides = [1, 1, 1]} : vector<10x10x8xf32> to vector<8x8x8xf32>
    %37 = vector.extract_strided_slice %35 {offsets = [0, 1, 0], sizes = [8, 8, 8], strides = [1, 1, 1]} : vector<10x10x8xf32> to vector<8x8x8xf32>
    %38 = vector.extract_strided_slice %35 {offsets = [0, 2, 0], sizes = [8, 8, 8], strides = [1, 1, 1]} : vector<10x10x8xf32> to vector<8x8x8xf32>
    %39 = vector.extract_strided_slice %35 {offsets = [1, 0, 0], sizes = [8, 8, 8], strides = [1, 1, 1]} : vector<10x10x8xf32> to vector<8x8x8xf32>
    %40 = vector.extract_strided_slice %35 {offsets = [1, 1, 0], sizes = [8, 8, 8], strides = [1, 1, 1]} : vector<10x10x8xf32> to vector<8x8x8xf32>
    %41 = vector.extract_strided_slice %35 {offsets = [1, 2, 0], sizes = [8, 8, 8], strides = [1, 1, 1]} : vector<10x10x8xf32> to vector<8x8x8xf32>
    %42 = vector.extract_strided_slice %35 {offsets = [2, 0, 0], sizes = [8, 8, 8], strides = [1, 1, 1]} : vector<10x10x8xf32> to vector<8x8x8xf32>
    %43 = vector.extract_strided_slice %35 {offsets = [2, 1, 0], sizes = [8, 8, 8], strides = [1, 1, 1]} : vector<10x10x8xf32> to vector<8x8x8xf32>
    %44 = vector.extract_strided_slice %35 {offsets = [2, 2, 0], sizes = [8, 8, 8], strides = [1, 1, 1]} : vector<10x10x8xf32> to vector<8x8x8xf32>
    %45 = tpu.concatenate %36, %37, %38, %39, %40, %41, %42, %43, %44 in 2 : vector<8x8x8xf32>, vector<8x8x8xf32>, vector<8x8x8xf32>, vector<8x8x8xf32>, vector<8x8x8xf32>, vector<8x8x8xf32>, vector<8x8x8xf32>, vector<8x8x8xf32>, vector<8x8x8xf32> -> vector<8x8x72xf32>
    %46 = vector.shape_cast %45 : vector<8x8x72xf32> to vector<64x72xf32>
    %47 = arith.truncf %46 : vector<64x72xf32> to vector<64x72xbf16>
    %c0_33 = arith.constant 0 : index
    %c0_34 = arith.constant 0 : index
    %48 = vector.load %arg4[%c0_33, %c0_34] : memref<72x8xbf16, #tpu.memory_space<vmem>>, vector<72x8xbf16>
    %cst_35 = arith.constant dense<0.000000e+00> : vector<64x8xf32>
    %49 = tpu.matmul %47, %48, %cst_35 {dimension_numbers = #tpu.dot_dimension_numbers<[1], [0], [0], [1], [0, 0, 1, 1], [], []>} : vector<64x72xbf16>, vector<72x8xbf16>, vector<64x8xf32> -> vector<64x8xf32>
    %c0_36 = arith.constant 0 : index
    %c0_37 = arith.constant 0 : index
    %50 = vector.load %arg5[%c0_36, %c0_37] : memref<1x8xf32, #tpu.memory_space<vmem>>, vector<1x8xf32>
    %51 = vector.broadcast %50 : vector<1x8xf32> to vector<64x8xf32>
    %52 = arith.addf %49, %51 : vector<64x8xf32>
    %cst_38 = arith.constant 0.000000e+00 : f32
    %53 = vector.broadcast %cst_38 : f32 to vector<64x8xf32>
    %54 = arith.maximumf %52, %53 : vector<64x8xf32>
    %55 = vector.shape_cast %54 : vector<64x8xf32> to vector<8x8x8xf32>
    %c0_39 = arith.constant 0 : index
    %c0_40 = arith.constant 0 : index
    %c0_41 = arith.constant 0 : index
    %c0_42 = arith.constant 0 : index
    %56 = vector.load %arg6[%c0_39, %c0_40, %c0_41, %c0_42] : memref<1x8x8x8xf32, #tpu.memory_space<vmem>>, vector<1x8x8x8xf32>
    %57 = vector.shape_cast %56 : vector<1x8x8x8xf32> to vector<8x8x8xf32>
    %58 = vector.shape_cast %55 : vector<8x8x8xf32> to vector<1x8x8x8xf32>
    tpu.vector_store %arg6[%c0_39, %c0_40, %c0_41, %c0_42], %58 {strides = array<i32>} : memref<1x8x8x8xf32, #tpu.memory_space<vmem>>, vector<1x8x8x8xf32>,
    return
  }
  func.func @transform_0(%arg0: i32) -> (i32, i32, i32, i32, i32) {
    %c0_i32 = arith.constant 0 : i32
    %c0_i32_0 = arith.constant 0 : i32
    %c0_i32_1 = arith.constant 0 : i32
    %c0_i32_2 = arith.constant 0 : i32
    %c0_i32_3 = arith.constant 0 : i32
    return %arg0, %c0_i32, %c0_i32_0, %c0_i32_1, %c0_i32_2 : i32, i32, i32, i32, i32
  }
  func.func @transform_1(%arg0: i32) -> (i32, i32) {
    %c0_i32 = arith.constant 0 : i32
    %c0_i32_0 = arith.constant 0 : i32
    %c0_i32_1 = arith.constant 0 : i32
    return %c0_i32, %c0_i32_0 : i32, i32
  }
  func.func @transform_2(%arg0: i32) -> (i32, i32) {
    %c0_i32 = arith.constant 0 : i32
    %c0_i32_0 = arith.constant 0 : i32
    %c0_i32_1 = arith.constant 0 : i32
    return %c0_i32, %c0_i32_0 : i32, i32
  }
  func.func @transform_3(%arg0: i32) -> (i32, i32) {
    %c0_i32 = arith.constant 0 : i32
    %c0_i32_0 = arith.constant 0 : i32
    %c0_i32_1 = arith.constant 0 : i32
    return %c0_i32, %c0_i32_0 : i32, i32
  }
  func.func @transform_4(%arg0: i32) -> (i32, i32) {
    %c0_i32 = arith.constant 0 : i32
    %c0_i32_0 = arith.constant 0 : i32
    %c0_i32_1 = arith.constant 0 : i32
    return %c0_i32, %c0_i32_0 : i32, i32
  }
  func.func @transform_5(%arg0: i32) -> (i32, i32, i32, i32) {
    %c0_i32 = arith.constant 0 : i32
    %c0_i32_0 = arith.constant 0 : i32
    %c0_i32_1 = arith.constant 0 : i32
    %c0_i32_2 = arith.constant 0 : i32
    return %arg0, %c0_i32, %c0_i32_0, %c0_i32_1 : i32, i32, i32, i32
  }
}

</mosaic_0001>

<llo_original>
// kernel: _lambda_.1
$region0: #{_lambda_.1}
  #allocation0 [shape = 'u32[]', space=smem, size = 0x4, offset = 0x4, fixed_abs, tag = 'smem constant byte address 0x4 - core index']
  #allocation1 [shape = 'u32[72,128]{1,0:T(1,128)}', space=vmem, size = 0x9000, scoped, tag = 'internal scratch']
  #allocation2 [shape = 'f32[10,10,4]{2,1,0:T(8,128)}', space=vmem, size = 0x14000, scoped, tag = 'scratch operand']
  #allocation3 [shape = 'f32[10,10,8]{2,1,0:T(8,128)}', space=vmem, size = 0x14000, scoped, tag = 'scratch operand']
  %s0 = inlined_call_operand.vmem [shape: f32[2,8,2,8,8], index: 0, kind: input, shape index: {}]
  %s1 = inlined_call_operand.vmem [shape: bf16[36,8], index: 1, kind: input, shape index: {}]
  %s2 = inlined_call_operand.vmem [shape: f32[1,8], index: 2, kind: input, shape index: {}]
  %s3 = inlined_call_operand.vmem [shape: bf16[72,8], index: 3, kind: input, shape index: {}]
  %s4 = inlined_call_operand.vmem [shape: f32[1,8], index: 4, kind: input, shape index: {}]
  %s5 = inlined_call_operand.vmem [shape: f32[2,8,8,8], index: 5, kind: output, shape index: {}]
  %s6 = sld [smem:[#allocation0]]
  $region53: #{_lambda_.1} parent=0
    _
  %s8 = ssub.s32 1, %s6
  %s9 = scalar_select 0, %s8, %s6
  loop: start=0, step=1, limit=4
  $region2: #{_lambda_.1} parent=0 // loop_pre_header
    _
  $region3: #{_lambda_.1} parent=0 // loop_header
    %s11 = sphi 0, %s15
    %p12 = scmp.ge.s32.totalorder %s11, 4
    %s21 = sphi 0, %s23
    %s24 = sphi 0, %s21
    %s25 = sphi 0, %s24
    %s41 = sphi 0, %s25
    %s45 = sphi 0, %s45
    %s47 = sphi 0, %s45
    %s48 = sphi 0, %s47
    %s62 = sphi 0, %s48
    %s66 = sphi 0, %s66
    %s68 = sphi 0, %s66
    %s69 = sphi 0, %s68
    %s83 = sphi 0, %s69
    %s87 = sphi 0, %s87
    %s89 = sphi 0, %s87
    %s90 = sphi 0, %s89
    %s104 = sphi 0, %s90
    %s108 = sphi 0, %s108
    %s110 = sphi 0, %s108
    %s111 = sphi 0, %s110
    %s125 = sphi 0, %s111
    %s131 = sphi 0, %s133
    %s134 = sphi 0, %s131
    %s135 = sphi 0, %s134
    %s151 = sphi 0, %s135
  $region4: #{_lambda_.1} parent=0 // loop_header_branch
    %14 = sbr.rel (%p12) target = $region8
  $region5: #{_lambda_.1} parent=0 // loop_body
    %s16 = ssub.s32 %s11, 1
    %s17 = ssub.s32 %s11, 2
    %s18 = sadd.s32 %s11, 1
    %s19 = ssub.s32 %s11, %s18
    %p20 = scmp.eq.s32.totalorder %s19, 0
    %s22 = sadd.s32 %s21, 1
    %s23 = scalar_select %p20, %s21, %s22
    %p26 = pneg %p20
    %p27 = scmp.eq.s32.totalorder %s11, 1
    %p28 = por %p26, %p27
    %p29 = scmp.ne.s32.totalorder %s21, %s24
    %p30 = scmp.eq.s32.totalorder %s11, 0
    %p31 = por %p29, %p30
    %p32 = scmp.ne.s32.totalorder %s21, %s24
    %p33 = scmp.eq.s32.totalorder %s16, 1
    %p34 = por %p32, %p33
    %p35 = scmp.ne.s32.totalorder %s24, %s25
    %p36 = scmp.eq.s32.totalorder %s16, 0
    %p37 = por %p35, %p36
    %p38 = scmp.ne.s32.totalorder %s24, %s25
    %p39 = scmp.eq.s32.totalorder %s17, 1
    %p40 = por %p38, %p39
    %p42 = scmp.ne.s32.totalorder %s25, %s41
    %p43 = scmp.eq.s32.totalorder %s17, 0
    %p44 = por %p42, %p43
    %s46 = sadd.s32 %s45, 1
    %p49 = scmp.eq.s32.totalorder %s11, 1
    %p50 = scmp.ne.s32.totalorder %s45, %s47
    %p51 = scmp.eq.s32.totalorder %s11, 0
    %p52 = por %p50, %p51
    %p53 = scmp.ne.s32.totalorder %s45, %s47
    %p54 = scmp.eq.s32.totalorder %s16, 1
    %p55 = por %p53, %p54
    %p56 = scmp.ne.s32.totalorder %s47, %s48
    %p57 = scmp.eq.s32.totalorder %s16, 0
    %p58 = por %p56, %p57
    %p59 = scmp.ne.s32.totalorder %s47, %s48
    %p60 = scmp.eq.s32.totalorder %s17, 1
    %p61 = por %p59, %p60
    %p63 = scmp.ne.s32.totalorder %s48, %s62
    %p64 = scmp.eq.s32.totalorder %s17, 0
    %p65 = por %p63, %p64
    %s67 = sadd.s32 %s66, 1
    %p70 = scmp.eq.s32.totalorder %s11, 1
    %p71 = scmp.ne.s32.totalorder %s66, %s68
    %p72 = scmp.eq.s32.totalorder %s11, 0
    %p73 = por %p71, %p72
    %p74 = scmp.ne.s32.totalorder %s66, %s68
    %p75 = scmp.eq.s32.totalorder %s16, 1
    %p76 = por %p74, %p75
    %p77 = scmp.ne.s32.totalorder %s68, %s69
    %p78 = scmp.eq.s32.totalorder %s16, 0
    %p79 = por %p77, %p78
    %p80 = scmp.ne.s32.totalorder %s68, %s69
    %p81 = scmp.eq.s32.totalorder %s17, 1
    %p82 = por %p80, %p81
    %p84 = scmp.ne.s32.totalorder %s69, %s83
    %p85 = scmp.eq.s32.totalorder %s17, 0
    %p86 = por %p84, %p85
    %s88 = sadd.s32 %s87, 1
    %p91 = scmp.eq.s32.totalorder %s11, 1
    %p92 = scmp.ne.s32.totalorder %s87, %s89
    %p93 = scmp.eq.s32.totalorder %s11, 0
    %p94 = por %p92, %p93
    %p95 = scmp.ne.s32.totalorder %s87, %s89
    %p96 = scmp.eq.s32.totalorder %s16, 1
    %p97 = por %p95, %p96
    %p98 = scmp.ne.s32.totalorder %s89, %s90
    %p99 = scmp.eq.s32.totalorder %s16, 0
    %p100 = por %p98, %p99
    %p101 = scmp.ne.s32.totalorder %s89, %s90
    %p102 = scmp.eq.s32.totalorder %s17, 1
    %p103 = por %p101, %p102
    %p105 = scmp.ne.s32.totalorder %s90, %s104
    %p106 = scmp.eq.s32.totalorder %s17, 0
    %p107 = por %p105, %p106
    %s109 = sadd.s32 %s108, 1
    %p112 = scmp.eq.s32.totalorder %s11, 1
    %p113 = scmp.ne.s32.totalorder %s108, %s110
    %p114 = scmp.eq.s32.totalorder %s11, 0
    %p115 = por %p113, %p114
    %p116 = scmp.ne.s32.totalorder %s108, %s110
    %p117 = scmp.eq.s32.totalorder %s16, 1
    %p118 = por %p116, %p117
    %p119 = scmp.ne.s32.totalorder %s110, %s111
    %p120 = scmp.eq.s32.totalorder %s16, 0
    %p121 = por %p119, %p120
    %p122 = scmp.ne.s32.totalorder %s110, %s111
    %p123 = scmp.eq.s32.totalorder %s17, 1
    %p124 = por %p122, %p123
    %p126 = scmp.ne.s32.totalorder %s111, %s125
    %p127 = scmp.eq.s32.totalorder %s17, 0
    %p128 = por %p126, %p127
    %s129 = ssub.s32 %s11, %s18
    %p130 = scmp.eq.s32.totalorder %s129, 0
    %s132 = sadd.s32 %s131, 1
    %s133 = scalar_select %p130, %s131, %s132
    %p136 = pneg %p130
    %p137 = scmp.eq.s32.totalorder %s11, 1
    %p138 = por %p136, %p137
    %p139 = scmp.ne.s32.totalorder %s131, %s134
    %p140 = scmp.eq.s32.totalorder %s11, 0
    %p141 = por %p139, %p140
    %p142 = scmp.ne.s32.totalorder %s131, %s134
    %p143 = scmp.eq.s32.totalorder %s16, 1
    %p144 = por %p142, %p143
    %p145 = scmp.ne.s32.totalorder %s134, %s135
    %p146 = scmp.eq.s32.totalorder %s16, 0
    %p147 = por %p145, %p146
    %p148 = scmp.ne.s32.totalorder %s134, %s135
    %p149 = scmp.eq.s32.totalorder %s17, 1
    %p150 = por %p148, %p149
    %p152 = scmp.ne.s32.totalorder %s135, %s151
    %p153 = scmp.eq.s32.totalorder %s17, 0
    %p154 = por %p152, %p153
    %p155 = scmp.le.s32.totalorder 1, %s11
    %p156 = scmp.lt.s32.totalorder %s11, 3
    %p157 = pnand %p155, %p156
    %p158 = pneg %p157
    // Predicated region
    $region9: #{_lambda_.1} parent=5 // pred_check
      _
    $region10: #{_lambda_.1} parent=5 // pred_check_branch
      %160 = sbr.rel (%p157) target = $region12
    $region11: #{_lambda_.1} parent=5 // pred_region
      %s161 = ssub.s32 %s11, 1
      // Predicated region
      $region13: #{_lambda_.1} parent=11 // pred_check
        %p162 = pneg %p58
      $region14: #{_lambda_.1} parent=11 // pred_check_branch
        %164 = sbr.rel (%p162) target = $region16
      $region15: #{_lambda_.1} parent=11 // pred_region
        _
      $region16: #{_lambda_.1} parent=11 // pred_fallthru
        _
      // Predicated region
      $region17: #{_lambda_.1} parent=11 // pred_check
        %p165 = pneg %p79
      $region18: #{_lambda_.1} parent=11 // pred_check_branch
        %167 = sbr.rel (%p165) target = $region20
      $region19: #{_lambda_.1} parent=11 // pred_region
        _
      $region20: #{_lambda_.1} parent=11 // pred_fallthru
        _
      // Predicated region
      $region21: #{_lambda_.1} parent=11 // pred_check
        %p168 = pneg %p100
      $region22: #{_lambda_.1} parent=11 // pred_check_branch
        %170 = sbr.rel (%p168) target = $region24
      $region23: #{_lambda_.1} parent=11 // pred_region
        _
      $region24: #{_lambda_.1} parent=11 // pred_fallthru
        _
      // Predicated region
      $region25: #{_lambda_.1} parent=11 // pred_check
        %p171 = pneg %p121
      $region26: #{_lambda_.1} parent=11 // pred_check_branch
        %173 = sbr.rel (%p171) target = $region28
      $region27: #{_lambda_.1} parent=11 // pred_region
        _
      $region28: #{_lambda_.1} parent=11 // pred_fallthru
        _
    $region12: #{_lambda_.1} parent=5 // pred_fallthru
      _
    %p174 = scmp.lt.s32.totalorder %s11, 2
    // Predicated region
    $region29: #{_lambda_.1} parent=5 // pred_check
      %p175 = pneg %p174
    $region30: #{_lambda_.1} parent=5 // pred_check_branch
      %177 = sbr.rel (%p175) target = $region32
    $region31: #{_lambda_.1} parent=5 // pred_region
      // Predicated region
      $region33: #{_lambda_.1} parent=31 // pred_check
        %p178 = pneg %p31
      $region34: #{_lambda_.1} parent=31 // pred_check_branch
        %180 = sbr.rel (%p178) target = $region36
      $region35: #{_lambda_.1} parent=31 // pred_region
        %p181 = scmp.lt.s32.totalorder %s11, 1
        %s182 = scalar_select %p181, %s11, 1
        %s183 = smul.addr %s182, 16
        %s184 = smul.addr %s183, 8
        %s185 = scalar_lea.vmem %s0, %s184
      $region36: #{_lambda_.1} parent=31 // pred_fallthru
        _
    $region32: #{_lambda_.1} parent=5 // pred_fallthru
      _
    %p186 = scmp.le.s32.totalorder 1, %s11
    %p187 = scmp.lt.s32.totalorder %s11, 3
    %p188 = pnand %p186, %p187
    %p189 = pneg %p188
    // Predicated region
    $region37: #{_lambda_.1} parent=5 // pred_check
      _
    $region38: #{_lambda_.1} parent=5 // pred_check_branch
      %191 = sbr.rel (%p188) target = $region40
    $region39: #{_lambda_.1} parent=5 // pred_region
      %s192 = ssub.s32 %s11, 1
      %p193 = scmp.lt.s32.totalorder %s16, 1
      %s194 = scalar_select %p193, %s16, 1
      %s195 = smul.addr %s194, 16
      %s196 = smul.addr %s195, 8
      %s197 = scalar_lea.vmem %s0, %s196
      %p198 = pneg %p37
      %p199 = pneg %p34
      %p200 = pneg %p58
      %p201 = pneg %p55
      %p202 = pneg %p79
      %p203 = pneg %p76
      %p204 = pneg %p100
      %p205 = pneg %p97
      %p206 = pneg %p121
      %p207 = pneg %p118
      %p208 = pneg %p147
      %p209 = pneg %p144
      %p210 = scmp.lt.s32.totalorder %s16, 1
      %s211 = scalar_select %p210, %s16, 1
      %s212 = smul.addr %s211, 8
      %s213 = smul.addr %s212, 8
      %s214 = scalar_lea.vmem %s5, %s213
      %p215 = scmp.lt.s32.totalorder %s16, 1
      %s216 = scalar_select %p215, %s16, 1
      %s217 = smul.addr %s216, 16
      %s218 = smul.addr %s217, 8
      %s219 = scalar_lea.vmem %s0, %s218
      %p220 = scmp.lt.s32.totalorder %s16, 1
      %s221 = scalar_select %p220, %s16, 1
      %s222 = smul.addr %s221, 8
      %s223 = smul.addr %s222, 8
      %s224 = scalar_lea.vmem %s5, %s223
      %v226 = vld [vmem:[%s219] sm:$0xff]
      %v227 = vld [vmem:[%s219 + $0x10] sm:$0xff]
      %v228 = vld [vmem:[%s219 + $0x20] sm:$0xff]
      %v229 = vld [vmem:[%s219 + $0x30] sm:$0xff]
      %v230 = vld [vmem:[%s219 + $0x40] sm:$0xff]
      %v231 = vld [vmem:[%s219 + $0x50] sm:$0xff]
      %v232 = vld [vmem:[%s219 + $0x60] sm:$0xff]
      %v233 = vld [vmem:[%s219 + $0x70] sm:$0xff]
      %s234 = scalar_lea.vmem %s219, 8
      %v235 = vld [vmem:[%s234] sm:$0xff]
      %v236 = vld [vmem:[%s234 + $0x10] sm:$0xff]
      %v237 = vld [vmem:[%s234 + $0x20] sm:$0xff]
      %v238 = vld [vmem:[%s234 + $0x30] sm:$0xff]
      %v239 = vld [vmem:[%s234 + $0x40] sm:$0xff]
      %v240 = vld [vmem:[%s234 + $0x50] sm:$0xff]
      %v241 = vld [vmem:[%s234 + $0x60] sm:$0xff]
      %v242 = vld [vmem:[%s234 + $0x70] sm:$0xff]
      %v243 = vmax.f32 %v226, %v235
      %v244 = vmax.f32 %v227, %v236
      %v245 = vmax.f32 %v228, %v237
      %v246 = vmax.f32 %v229, %v238
      %v247 = vmax.f32 %v230, %v239
      %v248 = vmax.f32 %v231, %v240
      %v249 = vmax.f32 %v232, %v241
      %v250 = vmax.f32 %v233, %v242
      %259 = vrot.lane.b32.xlu0 %v243, 124
      %v260 = vpop.permute.xlu0 %259
      %261 = vrot.lane.b32.xlu0 %v244, 124
      %v262 = vpop.permute.xlu0 %261
      %263 = vrot.lane.b32.xlu0 %v245, 124
      %v264 = vpop.permute.xlu0 %263
      %265 = vrot.lane.b32.xlu0 %v246, 124
      %v266 = vpop.permute.xlu0 %265
      %267 = vrot.lane.b32.xlu0 %v247, 124
      %v268 = vpop.permute.xlu0 %267
      %269 = vrot.lane.b32.xlu0 %v248, 124
      %v270 = vpop.permute.xlu0 %269
      %271 = vrot.lane.b32.xlu0 %v249, 124
      %v272 = vpop.permute.xlu0 %271
      %273 = vrot.lane.b32.xlu0 %v250, 124
      %v274 = vpop.permute.xlu0 %273
      %v283 = vmax.f32 %v243, %v260
      %v284 = vmax.f32 %v244, %v262
      %v285 = vmax.f32 %v245, %v264
      %v286 = vmax.f32 %v246, %v266
      %v287 = vmax.f32 %v247, %v268
      %v288 = vmax.f32 %v248, %v270
      %v289 = vmax.f32 %v249, %v272
      %v290 = vmax.f32 %v250, %v274
      %vm291 = vcmask 31744
      %292 = vst.msk [vmem:[#allocation2] sm:$0xff] %vm291, 0.0
      %vm293 = vcmask 25600
      %294 = vst.msk [vmem:[#allocation2 + $0x8] sm:$0x3] %vm293, 0.0
      %295 = vst.msk [vmem:[#allocation2 + $0x10] sm:$0xff] %vm291, 0.0
      %296 = vst.msk [vmem:[#allocation2 + $0x18] sm:$0x3] %vm293, 0.0
      %297 = vst.msk [vmem:[#allocation2 + $0x20] sm:$0xff] %vm291, 0.0
      %298 = vst.msk [vmem:[#allocation2 + $0x28] sm:$0x3] %vm293, 0.0
      %299 = vst.msk [vmem:[#allocation2 + $0x30] sm:$0xff] %vm291, 0.0
      %300 = vst.msk [vmem:[#allocation2 + $0x38] sm:$0x3] %vm293, 0.0
      %301 = vst.msk [vmem:[#allocation2 + $0x40] sm:$0xff] %vm291, 0.0
      %302 = vst.msk [vmem:[#allocation2 + $0x48] sm:$0x3] %vm293, 0.0
      %303 = vst.msk [vmem:[#allocation2 + $0x50] sm:$0xff] %vm291, 0.0
      %304 = vst.msk [vmem:[#allocation2 + $0x58] sm:$0x3] %vm293, 0.0
      %305 = vst.msk [vmem:[#allocation2 + $0x60] sm:$0xff] %vm291, 0.0
      %306 = vst.msk [vmem:[#allocation2 + $0x68] sm:$0x3] %vm293, 0.0
      %307 = vst.msk [vmem:[#allocation2 + $0x70] sm:$0xff] %vm291, 0.0
      %308 = vst.msk [vmem:[#allocation2 + $0x78] sm:$0x3] %vm293, 0.0
      %309 = vst.msk [vmem:[#allocation2 + $0x80] sm:$0xff] %vm291, 0.0
      %310 = vst.msk [vmem:[#allocation2 + $0x88] sm:$0x3] %vm293, 0.0
      %311 = vst.msk [vmem:[#allocation2 + $0x90] sm:$0xff] %vm291, 0.0
      %312 = vst.msk [vmem:[#allocation2 + $0x98] sm:$0x3] %vm293, 0.0
      %s313 = scalar_lea.vmem [#allocation2], 16
      %314 = vst.msk [vmem:[%s313 + $0x1] sm:$0xff] %vm291, %v283
      %315 = vst.msk [vmem:[%s313 + $0x11] sm:$0xff] %vm291, %v284
      %316 = vst.msk [vmem:[%s313 + $0x21] sm:$0xff] %vm291, %v285
      %317 = vst.msk [vmem:[%s313 + $0x31] sm:$0xff] %vm291, %v286
      %318 = vst.msk [vmem:[%s313 + $0x41] sm:$0xff] %vm291, %v287
      %319 = vst.msk [vmem:[%s313 + $0x51] sm:$0xff] %vm291, %v288
      %320 = vst.msk [vmem:[%s313 + $0x61] sm:$0xff] %vm291, %v289
      %321 = vst.msk [vmem:[%s313 + $0x71] sm:$0xff] %vm291, %v290
      %v322 = vld [vmem:[#allocation2] sm:$0xff]
      %v323 = vld [vmem:[#allocation2 + $0x8] sm:$0x3]
      %v324 = vld [vmem:[#allocation2 + $0x10] sm:$0xff]
      %v325 = vld [vmem:[#allocation2 + $0x18] sm:$0x3]
      %v326 = vld [vmem:[#allocation2 + $0x20] sm:$0xff]
      %v327 = vld [vmem:[#allocation2 + $0x28] sm:$0x3]
      %v328 = vld [vmem:[#allocation2 + $0x30] sm:$0xff]
      %v329 = vld [vmem:[#allocation2 + $0x38] sm:$0x3]
      %v330 = vld [vmem:[#allocation2 + $0x40] sm:$0xff]
      %v331 = vld [vmem:[#allocation2 + $0x48] sm:$0x3]
      %v332 = vld [vmem:[#allocation2 + $0x50] sm:$0xff]
      %v333 = vld [vmem:[#allocation2 + $0x58] sm:$0x3]
      %v334 = vld [vmem:[#allocation2 + $0x60] sm:$0xff]
      %v335 = vld [vmem:[#allocation2 + $0x68] sm:$0x3]
      %v336 = vld [vmem:[#allocation2 + $0x70] sm:$0xff]
      %v337 = vld [vmem:[#allocation2 + $0x78] sm:$0x3]
      %v338 = vld [vmem:[#allocation2 + $0x80] sm:$0xff]
      %v339 = vld [vmem:[#allocation2 + $0x88] sm:$0x3]
      %v340 = vld [vmem:[#allocation2 + $0x90] sm:$0xff]
      %v341 = vld [vmem:[#allocation2 + $0x98] sm:$0x3]
      %vm358 = vcmask 1046528
      %v359 = vrot.slane %v322, 1
      %v360 = vrot.slane %v323, 1
      %v361 = vsel %vm358, %v359, %v360
      %v362 = vrot.slane %v324, 1
      %v363 = vrot.slane %v325, 1
      %v364 = vsel %vm358, %v362, %v363
      %v365 = vrot.slane %v326, 1
      %v366 = vrot.slane %v327, 1
      %v367 = vsel %vm358, %v365, %v366
      %v368 = vrot.slane %v328, 1
      %v369 = vrot.slane %v329, 1
      %v370 = vsel %vm358, %v368, %v369
      %v371 = vrot.slane %v330, 1
      %v372 = vrot.slane %v331, 1
      %v373 = vsel %vm358, %v371, %v372
      %v374 = vrot.slane %v332, 1
      %v375 = vrot.slane %v333, 1
      %v376 = vsel %vm358, %v374, %v375
      %v377 = vrot.slane %v334, 1
      %v378 = vrot.slane %v335, 1
      %v379 = vsel %vm358, %v377, %v378
      %v380 = vrot.slane %v336, 1
      %v381 = vrot.slane %v337, 1
      %v382 = vsel %vm358, %v380, %v381
      %383 = vrot.lane.b32.xlu0 %v361, 4
      %v384 = vpop.permute.xlu0 %383
      %385 = vrot.lane.b32.xlu0 %v364, 4
      %v386 = vpop.permute.xlu0 %385
      %387 = vrot.lane.b32.xlu0 %v367, 4
      %v388 = vpop.permute.xlu0 %387
      %389 = vrot.lane.b32.xlu0 %v370, 4
      %v390 = vpop.permute.xlu0 %389
      %391 = vrot.lane.b32.xlu0 %v373, 4
      %v392 = vpop.permute.xlu0 %391
      %393 = vrot.lane.b32.xlu0 %v376, 4
      %v394 = vpop.permute.xlu0 %393
      %395 = vrot.lane.b32.xlu0 %v379, 4
      %v396 = vpop.permute.xlu0 %395
      %397 = vrot.lane.b32.xlu0 %v382, 4
      %v398 = vpop.permute.xlu0 %397
      %vm407 = vcmask 1045504
      %v408 = vrot.slane %v322, 2
      %v409 = vrot.slane %v323, 2
      %v410 = vsel %vm407, %v408, %v409
      %v411 = vrot.slane %v324, 2
      %v412 = vrot.slane %v325, 2
      %v413 = vsel %vm407, %v411, %v412
      %v414 = vrot.slane %v326, 2
      %v415 = vrot.slane %v327, 2
      %v416 = vsel %vm407, %v414, %v415
      %v417 = vrot.slane %v328, 2
      %v418 = vrot.slane %v329, 2
      %v419 = vsel %vm407, %v417, %v418
      %v420 = vrot.slane %v330, 2
      %v421 = vrot.slane %v331, 2
      %v422 = vsel %vm407, %v420, %v421
      %v423 = vrot.slane %v332, 2
      %v424 = vrot.slane %v333, 2
      %v425 = vsel %vm407, %v423, %v424
      %v426 = vrot.slane %v334, 2
      %v427 = vrot.slane %v335, 2
      %v428 = vsel %vm407, %v426, %v427
      %v429 = vrot.slane %v336, 2
      %v430 = vrot.slane %v337, 2
      %v431 = vsel %vm407, %v429, %v430
      %432 = vrot.lane.b32.xlu0 %v410, 8
      %v433 = vpop.permute.xlu0 %432
      %434 = vrot.lane.b32.xlu0 %v413, 8
      %v435 = vpop.permute.xlu0 %434
      %436 = vrot.lane.b32.xlu0 %v416, 8
      %v437 = vpop.permute.xlu0 %436
      %438 = vrot.lane.b32.xlu0 %v419, 8
      %v439 = vpop.permute.xlu0 %438
      %440 = vrot.lane.b32.xlu0 %v422, 8
      %v441 = vpop.permute.xlu0 %440
      %442 = vrot.lane.b32.xlu0 %v425, 8
      %v443 = vpop.permute.xlu0 %442
      %444 = vrot.lane.b32.xlu0 %v428, 8
      %v445 = vpop.permute.xlu0 %444
      %446 = vrot.lane.b32.xlu0 %v431, 8
      %v447 = vpop.permute.xlu0 %446
      %457 = vrot.lane.b32.xlu0 %v324, 12
      %v458 = vpop.permute.xlu0 %457
      %459 = vrot.lane.b32.xlu0 %v326, 12
      %v460 = vpop.permute.xlu0 %459
      %461 = vrot.lane.b32.xlu0 %v328, 12
      %v462 = vpop.permute.xlu0 %461
      %463 = vrot.lane.b32.xlu0 %v330, 12
      %v464 = vpop.permute.xlu0 %463
      %465 = vrot.lane.b32.xlu0 %v332, 12
      %v466 = vpop.permute.xlu0 %465
      %467 = vrot.lane.b32.xlu0 %v334, 12
      %v468 = vpop.permute.xlu0 %467
      %469 = vrot.lane.b32.xlu0 %v336, 12
      %v470 = vpop.permute.xlu0 %469
      %471 = vrot.lane.b32.xlu0 %v338, 12
      %v472 = vpop.permute.xlu0 %471
      %v482 = vrot.slane %v338, 1
      %v483 = vrot.slane %v339, 1
      %v484 = vsel %vm358, %v482, %v483
      %485 = vrot.lane.b32.xlu0 %v364, 16
      %v486 = vpop.permute.xlu0 %485
      %487 = vrot.lane.b32.xlu0 %v367, 16
      %v488 = vpop.permute.xlu0 %487
      %489 = vrot.lane.b32.xlu0 %v370, 16
      %v490 = vpop.permute.xlu0 %489
      %491 = vrot.lane.b32.xlu0 %v373, 16
      %v492 = vpop.permute.xlu0 %491
      %493 = vrot.lane.b32.xlu0 %v376, 16
      %v494 = vpop.permute.xlu0 %493
      %495 = vrot.lane.b32.xlu0 %v379, 16
      %v496 = vpop.permute.xlu0 %495
      %497 = vrot.lane.b32.xlu0 %v382, 16
      %v498 = vpop.permute.xlu0 %497
      %499 = vrot.lane.b32.xlu0 %v484, 16
      %v500 = vpop.permute.xlu0 %499
      %v509 = vrot.slane %v338, 2
      %v510 = vrot.slane %v339, 2
      %v511 = vsel %vm407, %v509, %v510
      %512 = vrot.lane.b32.xlu0 %v413, 20
      %v513 = vpop.permute.xlu0 %512
      %514 = vrot.lane.b32.xlu0 %v416, 20
      %v515 = vpop.permute.xlu0 %514
      %516 = vrot.lane.b32.xlu0 %v419, 20
      %v517 = vpop.permute.xlu0 %516
      %518 = vrot.lane.b32.xlu0 %v422, 20
      %v519 = vpop.permute.xlu0 %518
      %520 = vrot.lane.b32.xlu0 %v425, 20
      %v521 = vpop.permute.xlu0 %520
      %522 = vrot.lane.b32.xlu0 %v428, 20
      %v523 = vpop.permute.xlu0 %522
      %524 = vrot.lane.b32.xlu0 %v431, 20
      %v525 = vpop.permute.xlu0 %524
      %526 = vrot.lane.b32.xlu0 %v511, 20
      %v527 = vpop.permute.xlu0 %526
      %537 = vrot.lane.b32.xlu0 %v326, 24
      %v538 = vpop.permute.xlu0 %537
      %539 = vrot.lane.b32.xlu0 %v328, 24
      %v540 = vpop.permute.xlu0 %539
      %541 = vrot.lane.b32.xlu0 %v330, 24
      %v542 = vpop.permute.xlu0 %541
      %543 = vrot.lane.b32.xlu0 %v332, 24
      %v544 = vpop.permute.xlu0 %543
      %545 = vrot.lane.b32.xlu0 %v334, 24
      %v546 = vpop.permute.xlu0 %545
      %547 = vrot.lane.b32.xlu0 %v336, 24
      %v548 = vpop.permute.xlu0 %547
      %549 = vrot.lane.b32.xlu0 %v338, 24
      %v550 = vpop.permute.xlu0 %549
      %551 = vrot.lane.b32.xlu0 %v340, 24
      %v552 = vpop.permute.xlu0 %551
      %v562 = vrot.slane %v340, 1
      %v563 = vrot.slane %v341, 1
      %v564 = vsel %vm358, %v562, %v563
      %565 = vrot.lane.b32.xlu0 %v367, 28
      %v566 = vpop.permute.xlu0 %565
      %567 = vrot.lane.b32.xlu0 %v370, 28
      %v568 = vpop.permute.xlu0 %567
      %569 = vrot.lane.b32.xlu0 %v373, 28
      %v570 = vpop.permute.xlu0 %569
      %571 = vrot.lane.b32.xlu0 %v376, 28
      %v572 = vpop.permute.xlu0 %571
      %573 = vrot.lane.b32.xlu0 %v379, 28
      %v574 = vpop.permute.xlu0 %573
      %575 = vrot.lane.b32.xlu0 %v382, 28
      %v576 = vpop.permute.xlu0 %575
      %577 = vrot.lane.b32.xlu0 %v484, 28
      %v578 = vpop.permute.xlu0 %577
      %579 = vrot.lane.b32.xlu0 %v564, 28
      %v580 = vpop.permute.xlu0 %579
      %v589 = vrot.slane %v340, 2
      %v590 = vrot.slane %v341, 2
      %v591 = vsel %vm407, %v589, %v590
      %592 = vrot.lane.b32.xlu0 %v416, 32
      %v593 = vpop.permute.xlu0 %592
      %594 = vrot.lane.b32.xlu0 %v419, 32
      %v595 = vpop.permute.xlu0 %594
      %596 = vrot.lane.b32.xlu0 %v422, 32
      %v597 = vpop.permute.xlu0 %596
      %598 = vrot.lane.b32.xlu0 %v425, 32
      %v599 = vpop.permute.xlu0 %598
      %600 = vrot.lane.b32.xlu0 %v428, 32
      %v601 = vpop.permute.xlu0 %600
      %602 = vrot.lane.b32.xlu0 %v431, 32
      %v603 = vpop.permute.xlu0 %602
      %604 = vrot.lane.b32.xlu0 %v511, 32
      %v605 = vpop.permute.xlu0 %604
      %606 = vrot.lane.b32.xlu0 %v591, 32
      %v607 = vpop.permute.xlu0 %606
      %v616 = vsel %vm291, %v322, %v384
      %v617 = vsel %vm291, %v324, %v386
      %v618 = vsel %vm291, %v326, %v388
      %v619 = vsel %vm291, %v328, %v390
      %v620 = vsel %vm291, %v330, %v392
      %v621 = vsel %vm291, %v332, %v394
      %v622 = vsel %vm291, %v334, %v396
      %v623 = vsel %vm291, %v336, %v398
      %vm624 = vcmask 64512
      %v625 = vsel %vm624, %v616, %v433
      %v626 = vsel %vm624, %v617, %v435
      %v627 = vsel %vm624, %v618, %v437
      %v628 = vsel %vm624, %v619, %v439
      %v629 = vsel %vm624, %v620, %v441
      %v630 = vsel %vm624, %v621, %v443
      %v631 = vsel %vm624, %v622, %v445
      %v632 = vsel %vm624, %v623, %v447
      %vm633 = vcmask 97280
      %v634 = vsel %vm633, %v625, %v458
      %v635 = vsel %vm633, %v626, %v460
      %v636 = vsel %vm633, %v627, %v462
      %v637 = vsel %vm633, %v628, %v464
      %v638 = vsel %vm633, %v629, %v466
      %v639 = vsel %vm633, %v630, %v468
      %v640 = vsel %vm633, %v631, %v470
      %v641 = vsel %vm633, %v632, %v472
      %vm642 = vcmask 130048
      %v643 = vsel %vm642, %v634, %v486
      %v644 = vsel %vm642, %v635, %v488
      %v645 = vsel %vm642, %v636, %v490
      %v646 = vsel %vm642, %v637, %v492
      %v647 = vsel %vm642, %v638, %v494
      %v648 = vsel %vm642, %v639, %v496
      %v649 = vsel %vm642, %v640, %v498
      %v650 = vsel %vm642, %v641, %v500
      %vm651 = vcmask 162816
      %v652 = vsel %vm651, %v643, %v513
      %v653 = vsel %vm651, %v644, %v515
      %v654 = vsel %vm651, %v645, %v517
      %v655 = vsel %vm651, %v646, %v519
      %v656 = vsel %vm651, %v647, %v521
      %v657 = vsel %vm651, %v648, %v523
      %v658 = vsel %vm651, %v649, %v525
      %v659 = vsel %vm651, %v650, %v527
      %vm660 = vcmask 195584
      %v661 = vsel %vm660, %v652, %v538
      %v662 = vsel %vm660, %v653, %v540
      %v663 = vsel %vm660, %v654, %v542
      %v664 = vsel %vm660, %v655, %v544
      %v665 = vsel %vm660, %v656, %v546
      %v666 = vsel %vm660, %v657, %v548
      %v667 = vsel %vm660, %v658, %v550
      %v668 = vsel %vm660, %v659, %v552
      %vm669 = vcmask 228352
      %v670 = vsel %vm669, %v661, %v566
      %v671 = vsel %vm669, %v662, %v568
      %v672 = vsel %vm669, %v663, %v570
      %v673 = vsel %vm669, %v664, %v572
      %v674 = vsel %vm669, %v665, %v574
      %v675 = vsel %vm669, %v666, %v576
      %v676 = vsel %vm669, %v667, %v578
      %v677 = vsel %vm669, %v668, %v580
      %vm678 = vcmask 261120
      %v679 = vsel %vm678, %v670, %v593
      %v680 = vsel %vm678, %v671, %v595
      %v681 = vsel %vm678, %v672, %v597
      %v682 = vsel %vm678, %v673, %v599
      %v683 = vsel %vm678, %v674, %v601
      %v684 = vsel %vm678, %v675, %v603
      %v685 = vsel %vm678, %v676, %v605
      %v686 = vsel %vm678, %v677, %v607
      %v687 = vpack.c.bf16 %v680, %v679
      %v688 = vpack.c.bf16 %v682, %v681
      %v689 = vpack.c.bf16 %v684, %v683
      %v690 = vpack.c.bf16 %v686, %v685
      %v691 = vld [vmem:[%s1] sm:$0xf]
      %v692 = vld [vmem:[%s1 + $0x4] sm:$0xf]
      %v693 = vld [vmem:[%s1 + $0x8] sm:$0xf]
      %v694 = vld [vmem:[%s1 + $0xc] sm:$0xf]
      %v695 = vld [vmem:[%s1 + $0x10] sm:$0x3]
      %v696 = vld [vmem:[%s2] sm:$0x1]
      %v698 = vperm.slane %v696, 0
      %v705 = vunpack.c.l.b16 %v691
      %v706 = vunpack.c.l.b16 %v692
      %v707 = vunpack.c.l.b16 %v693
      %v708 = vunpack.c.l.b16 %v694
      %v709 = vunpack.c.l.b16 %v695
      %v710 = vpack.c.b16 %v706, %v705
      %v711 = vpack.c.b16 %v708, %v707
      %v712 = vpack.c.b16 %v709, %v709
      %vm715 = vcmask 293888
      %v717 = vsel %vm715, %v687, 0
      %v720 = vsel %vm715, %v688, 0
      %v723 = vsel %vm715, %v689, 0
      %v726 = vsel %vm715, %v690, 0
      %vm728 = vcmask 1041408
      %v730 = vsel %vm728, %v712, 0
      %732 = vmatpush.bf16.msra.mxu0 0
      %733 = vmatpush.bf16.msra.mxu0 0
      %734 = vmatpush.bf16.msra.mxu0 0
      %735 = vmatpush.bf16.msra.mxu0 0
      %736 = vmatpush.bf16.msra.mxu0 0
      %737 = vmatpush.bf16.msra.mxu0 %v730
      %738 = vmatpush.bf16.msra.mxu0 %v711
      %739 = vmatpush.bf16.msra.mxu0 %v710
      %740 = vmatmul.bf16.gmra.mxu0 %v717
      %v741 = vpop.f32.mrf.mxu0
      %v742 = vadd.f32 %v698, %v741
      %v743 = vpop.f32.mrf.mxu0
      %v744 = vadd.f32 %v698, %v743
      %745 = vmatmul.bf16.gmra.mxu0 %v720
      %v746 = vpop.f32.mrf.mxu0
      %v747 = vadd.f32 %v698, %v746
      %v748 = vpop.f32.mrf.mxu0
      %v749 = vadd.f32 %v698, %v748
      %750 = vmatmul.bf16.gmra.mxu0 %v723
      %v751 = vpop.f32.mrf.mxu0
      %v752 = vadd.f32 %v698, %v751
      %v753 = vpop.f32.mrf.mxu0
      %v754 = vadd.f32 %v698, %v753
      %755 = vmatmul.bf16.gmra.mxu0 %v726
      %v756 = vpop.f32.mrf.mxu0
      %v757 = vadd.f32 %v698, %v756
      %v758 = vpop.f32.mrf.mxu0
      %v759 = vadd.f32 %v698, %v758
      %760 = vdwg.mxu0
      %v761 = vmax.f32 %v742, 0.0
      %v762 = vmax.f32 %v744, 0.0
      %v763 = vmax.f32 %v747, 0.0
      %v764 = vmax.f32 %v749, 0.0
      %v765 = vmax.f32 %v752, 0.0
      %v766 = vmax.f32 %v754, 0.0
      %v767 = vmax.f32 %v757, 0.0
      %v768 = vmax.f32 %v759, 0.0
      %769 = vst.msk [vmem:[#allocation3] sm:$0xff] %vm624, 0.0
      %vm770 = vcmask 58368
      %771 = vst.msk [vmem:[#allocation3 + $0x8] sm:$0x3] %vm770, 0.0
      %772 = vst.msk [vmem:[#allocation3 + $0x10] sm:$0xff] %vm624, 0.0
      %773 = vst.msk [vmem:[#allocation3 + $0x18] sm:$0x3] %vm770, 0.0
      %774 = vst.msk [vmem:[#allocation3 + $0x20] sm:$0xff] %vm624, 0.0
      %775 = vst.msk [vmem:[#allocation3 + $0x28] sm:$0x3] %vm770, 0.0
      %776 = vst.msk [vmem:[#allocation3 + $0x30] sm:$0xff] %vm624, 0.0
      %777 = vst.msk [vmem:[#allocation3 + $0x38] sm:$0x3] %vm770, 0.0
      %778 = vst.msk [vmem:[#allocation3 + $0x40] sm:$0xff] %vm624, 0.0
      %779 = vst.msk [vmem:[#allocation3 + $0x48] sm:$0x3] %vm770, 0.0
      %780 = vst.msk [vmem:[#allocation3 + $0x50] sm:$0xff] %vm624, 0.0
      %781 = vst.msk [vmem:[#allocation3 + $0x58] sm:$0x3] %vm770, 0.0
      %782 = vst.msk [vmem:[#allocation3 + $0x60] sm:$0xff] %vm624, 0.0
      %783 = vst.msk [vmem:[#allocation3 + $0x68] sm:$0x3] %vm770, 0.0
      %784 = vst.msk [vmem:[#allocation3 + $0x70] sm:$0xff] %vm624, 0.0
      %785 = vst.msk [vmem:[#allocation3 + $0x78] sm:$0x3] %vm770, 0.0
      %786 = vst.msk [vmem:[#allocation3 + $0x80] sm:$0xff] %vm624, 0.0
      %787 = vst.msk [vmem:[#allocation3 + $0x88] sm:$0x3] %vm770, 0.0
      %788 = vst.msk [vmem:[#allocation3 + $0x90] sm:$0xff] %vm624, 0.0
      %789 = vst.msk [vmem:[#allocation3 + $0x98] sm:$0x3] %vm770, 0.0
      %s790 = scalar_lea.vmem [#allocation3], 16
      %791 = vst.msk [vmem:[%s790 + $0x1] sm:$0xff] %vm624, %v761
      %792 = vst.msk [vmem:[%s790 + $0x11] sm:$0xff] %vm624, %v762
      %793 = vst.msk [vmem:[%s790 + $0x21] sm:$0xff] %vm624, %v763
      %794 = vst.msk [vmem:[%s790 + $0x31] sm:$0xff] %vm624, %v764
      %795 = vst.msk [vmem:[%s790 + $0x41] sm:$0xff] %vm624, %v765
      %796 = vst.msk [vmem:[%s790 + $0x51] sm:$0xff] %vm624, %v766
      %797 = vst.msk [vmem:[%s790 + $0x61] sm:$0xff] %vm624, %v767
      %798 = vst.msk [vmem:[%s790 + $0x71] sm:$0xff] %vm624, %v768
      %v799 = vld [vmem:[#allocation3] sm:$0xff]
      %v800 = vld [vmem:[#allocation3 + $0x8] sm:$0x3]
      %v801 = vld [vmem:[#allocation3 + $0x10] sm:$0xff]
      %v802 = vld [vmem:[#allocation3 + $0x18] sm:$0x3]
      %v803 = vld [vmem:[#allocation3 + $0x20] sm:$0xff]
      %v804 = vld [vmem:[#allocation3 + $0x28] sm:$0x3]
      %v805 = vld [vmem:[#allocation3 + $0x30] sm:$0xff]
      %v806 = vld [vmem:[#allocation3 + $0x38] sm:$0x3]
      %v807 = vld [vmem:[#allocation3 + $0x40] sm:$0xff]
      %v808 = vld [vmem:[#allocation3 + $0x48] sm:$0x3]
      %v809 = vld [vmem:[#allocation3 + $0x50] sm:$0xff]
      %v810 = vld [vmem:[#allocation3 + $0x58] sm:$0x3]
      %v811 = vld [vmem:[#allocation3 + $0x60] sm:$0xff]
      %v812 = vld [vmem:[#allocation3 + $0x68] sm:$0x3]
      %v813 = vld [vmem:[#allocation3 + $0x70] sm:$0xff]
      %v814 = vld [vmem:[#allocation3 + $0x78] sm:$0x3]
      %v815 = vld [vmem:[#allocation3 + $0x80] sm:$0xff]
      %v816 = vld [vmem:[#allocation3 + $0x88] sm:$0x3]
      %v817 = vld [vmem:[#allocation3 + $0x90] sm:$0xff]
      %v818 = vld [vmem:[#allocation3 + $0x98] sm:$0x3]
      %v835 = vrot.slane %v799, 1
      %v836 = vrot.slane %v800, 1
      %v837 = vsel %vm358, %v835, %v836
      %v838 = vrot.slane %v801, 1
      %v839 = vrot.slane %v802, 1
      %v840 = vsel %vm358, %v838, %v839
      %v841 = vrot.slane %v803, 1
      %v842 = vrot.slane %v804, 1
      %v843 = vsel %vm358, %v841, %v842
      %v844 = vrot.slane %v805, 1
      %v845 = vrot.slane %v806, 1
      %v846 = vsel %vm358, %v844, %v845
      %v847 = vrot.slane %v807, 1
      %v848 = vrot.slane %v808, 1
      %v849 = vsel %vm358, %v847, %v848
      %v850 = vrot.slane %v809, 1
      %v851 = vrot.slane %v810, 1
      %v852 = vsel %vm358, %v850, %v851
      %v853 = vrot.slane %v811, 1
      %v854 = vrot.slane %v812, 1
      %v855 = vsel %vm358, %v853, %v854
      %v856 = vrot.slane %v813, 1
      %v857 = vrot.slane %v814, 1
      %v858 = vsel %vm358, %v856, %v857
      %859 = vrot.lane.b32.xlu0 %v837, 8
      %v860 = vpop.permute.xlu0 %859
      %861 = vrot.lane.b32.xlu0 %v840, 8
      %v862 = vpop.permute.xlu0 %861
      %863 = vrot.lane.b32.xlu0 %v843, 8
      %v864 = vpop.permute.xlu0 %863
      %865 = vrot.lane.b32.xlu0 %v846, 8
      %v866 = vpop.permute.xlu0 %865
      %867 = vrot.lane.b32.xlu0 %v849, 8
      %v868 = vpop.permute.xlu0 %867
      %869 = vrot.lane.b32.xlu0 %v852, 8
      %v870 = vpop.permute.xlu0 %869
      %871 = vrot.lane.b32.xlu0 %v855, 8
      %v872 = vpop.permute.xlu0 %871
      %873 = vrot.lane.b32.xlu0 %v858, 8
      %v874 = vpop.permute.xlu0 %873
      %v883 = vrot.slane %v799, 2
      %v884 = vrot.slane %v800, 2
      %v885 = vsel %vm407, %v883, %v884
      %v886 = vrot.slane %v801, 2
      %v887 = vrot.slane %v802, 2
      %v888 = vsel %vm407, %v886, %v887
      %v889 = vrot.slane %v803, 2
      %v890 = vrot.slane %v804, 2
      %v891 = vsel %vm407, %v889, %v890
      %v892 = vrot.slane %v805, 2
      %v893 = vrot.slane %v806, 2
      %v894 = vsel %vm407, %v892, %v893
      %v895 = vrot.slane %v807, 2
      %v896 = vrot.slane %v808, 2
      %v897 = vsel %vm407, %v895, %v896
      %v898 = vrot.slane %v809, 2
      %v899 = vrot.slane %v810, 2
      %v900 = vsel %vm407, %v898, %v899
      %v901 = vrot.slane %v811, 2
      %v902 = vrot.slane %v812, 2
      %v903 = vsel %vm407, %v901, %v902
      %v904 = vrot.slane %v813, 2
      %v905 = vrot.slane %v814, 2
      %v906 = vsel %vm407, %v904, %v905
      %907 = vrot.lane.b32.xlu0 %v885, 16
      %v908 = vpop.permute.xlu0 %907
      %909 = vrot.lane.b32.xlu0 %v888, 16
      %v910 = vpop.permute.xlu0 %909
      %911 = vrot.lane.b32.xlu0 %v891, 16
      %v912 = vpop.permute.xlu0 %911
      %913 = vrot.lane.b32.xlu0 %v894, 16
      %v914 = vpop.permute.xlu0 %913
      %915 = vrot.lane.b32.xlu0 %v897, 16
      %v916 = vpop.permute.xlu0 %915
      %917 = vrot.lane.b32.xlu0 %v900, 16
      %v918 = vpop.permute.xlu0 %917
      %919 = vrot.lane.b32.xlu0 %v903, 16
      %v920 = vpop.permute.xlu0 %919
      %921 = vrot.lane.b32.xlu0 %v906, 16
      %v922 = vpop.permute.xlu0 %921
      %932 = vrot.lane.b32.xlu0 %v801, 24
      %v933 = vpop.permute.xlu0 %932
      %934 = vrot.lane.b32.xlu0 %v803, 24
      %v935 = vpop.permute.xlu0 %934
      %936 = vrot.lane.b32.xlu0 %v805, 24
      %v937 = vpop.permute.xlu0 %936
      %938 = vrot.lane.b32.xlu0 %v807, 24
      %v939 = vpop.permute.xlu0 %938
      %940 = vrot.lane.b32.xlu0 %v809, 24
      %v941 = vpop.permute.xlu0 %940
      %942 = vrot.lane.b32.xlu0 %v811, 24
      %v943 = vpop.permute.xlu0 %942
      %944 = vrot.lane.b32.xlu0 %v813, 24
      %v945 = vpop.permute.xlu0 %944
      %946 = vrot.lane.b32.xlu0 %v815, 24
      %v947 = vpop.permute.xlu0 %946
      %v957 = vrot.slane %v815, 1
      %v958 = vrot.slane %v816, 1
      %v959 = vsel %vm358, %v957, %v958
      %960 = vrot.lane.b32.xlu0 %v840, 32
      %v961 = vpop.permute.xlu0 %960
      %962 = vrot.lane.b32.xlu0 %v843, 32
      %v963 = vpop.permute.xlu0 %962
      %964 = vrot.lane.b32.xlu0 %v846, 32
      %v965 = vpop.permute.xlu0 %964
      %966 = vrot.lane.b32.xlu0 %v849, 32
      %v967 = vpop.permute.xlu0 %966
      %968 = vrot.lane.b32.xlu0 %v852, 32
      %v969 = vpop.permute.xlu0 %968
      %970 = vrot.lane.b32.xlu0 %v855, 32
      %v971 = vpop.permute.xlu0 %970
      %972 = vrot.lane.b32.xlu0 %v858, 32
      %v973 = vpop.permute.xlu0 %972
      %974 = vrot.lane.b32.xlu0 %v959, 32
      %v975 = vpop.permute.xlu0 %974
      %v984 = vrot.slane %v815, 2
      %v985 = vrot.slane %v816, 2
      %v986 = vsel %vm407, %v984, %v985
      %987 = vrot.lane.b32.xlu0 %v888, 40
      %v988 = vpop.permute.xlu0 %987
      %989 = vrot.lane.b32.xlu0 %v891, 40
      %v990 = vpop.permute.xlu0 %989
      %991 = vrot.lane.b32.xlu0 %v894, 40
      %v992 = vpop.permute.xlu0 %991
      %993 = vrot.lane.b32.xlu0 %v897, 40
      %v994 = vpop.permute.xlu0 %993
      %995 = vrot.lane.b32.xlu0 %v900, 40
      %v996 = vpop.permute.xlu0 %995
      %997 = vrot.lane.b32.xlu0 %v903, 40
      %v998 = vpop.permute.xlu0 %997
      %999 = vrot.lane.b32.xlu0 %v906, 40
      %v1000 = vpop.permute.xlu0 %999
      %1001 = vrot.lane.b32.xlu0 %v986, 40
      %v1002 = vpop.permute.xlu0 %1001
      %1012 = vrot.lane.b32.xlu0 %v803, 48
      %v1013 = vpop.permute.xlu0 %1012
      %1014 = vrot.lane.b32.xlu0 %v805, 48
      %v1015 = vpop.permute.xlu0 %1014
      %1016 = vrot.lane.b32.xlu0 %v807, 48
      %v1017 = vpop.permute.xlu0 %1016
      %1018 = vrot.lane.b32.xlu0 %v809, 48
      %v1019 = vpop.permute.xlu0 %1018
      %1020 = vrot.lane.b32.xlu0 %v811, 48
      %v1021 = vpop.permute.xlu0 %1020
      %1022 = vrot.lane.b32.xlu0 %v813, 48
      %v1023 = vpop.permute.xlu0 %1022
      %1024 = vrot.lane.b32.xlu0 %v815, 48
      %v1025 = vpop.permute.xlu0 %1024
      %1026 = vrot.lane.b32.xlu0 %v817, 48
      %v1027 = vpop.permute.xlu0 %1026
      %v1037 = vrot.slane %v817, 1
      %v1038 = vrot.slane %v818, 1
      %v1039 = vsel %vm358, %v1037, %v1038
      %1040 = vrot.lane.b32.xlu0 %v843, 56
      %v1041 = vpop.permute.xlu0 %1040
      %1042 = vrot.lane.b32.xlu0 %v846, 56
      %v1043 = vpop.permute.xlu0 %1042
      %1044 = vrot.lane.b32.xlu0 %v849, 56
      %v1045 = vpop.permute.xlu0 %1044
      %1046 = vrot.lane.b32.xlu0 %v852, 56
      %v1047 = vpop.permute.xlu0 %1046
      %1048 = vrot.lane.b32.xlu0 %v855, 56
      %v1049 = vpop.permute.xlu0 %1048
      %1050 = vrot.lane.b32.xlu0 %v858, 56
      %v1051 = vpop.permute.xlu0 %1050
      %1052 = vrot.lane.b32.xlu0 %v959, 56
      %v1053 = vpop.permute.xlu0 %1052
      %1054 = vrot.lane.b32.xlu0 %v1039, 56
      %v1055 = vpop.permute.xlu0 %1054
      %v1064 = vrot.slane %v817, 2
      %v1065 = vrot.slane %v818, 2
      %v1066 = vsel %vm407, %v1064, %v1065
      %1067 = vrot.lane.b32.xlu0 %v891, 64
      %v1068 = vpop.permute.xlu0 %1067
      %1069 = vrot.lane.b32.xlu0 %v894, 64
      %v1070 = vpop.permute.xlu0 %1069
      %1071 = vrot.lane.b32.xlu0 %v897, 64
      %v1072 = vpop.permute.xlu0 %1071
      %1073 = vrot.lane.b32.xlu0 %v900, 64
      %v1074 = vpop.permute.xlu0 %1073
      %1075 = vrot.lane.b32.xlu0 %v903, 64
      %v1076 = vpop.permute.xlu0 %1075
      %1077 = vrot.lane.b32.xlu0 %v906, 64
      %v1078 = vpop.permute.xlu0 %1077
      %1079 = vrot.lane.b32.xlu0 %v986, 64
      %v1080 = vpop.permute.xlu0 %1079
      %1081 = vrot.lane.b32.xlu0 %v1066, 64
      %v1082 = vpop.permute.xlu0 %1081
      %v1091 = vsel %vm624, %v799, %v860
      %v1092 = vsel %vm624, %v801, %v862
      %v1093 = vsel %vm624, %v803, %v864
      %v1094 = vsel %vm624, %v805, %v866
      %v1095 = vsel %vm624, %v807, %v868
      %v1096 = vsel %vm624, %v809, %v870
      %v1097 = vsel %vm624, %v811, %v872
      %v1098 = vsel %vm624, %v813, %v874
      %v1099 = vsel %vm642, %v1091, %v908
      %v1100 = vsel %vm642, %v1092, %v910
      %v1101 = vsel %vm642, %v1093, %v912
      %v1102 = vsel %vm642, %v1094, %v914
      %v1103 = vsel %vm642, %v1095, %v916
      %v1104 = vsel %vm642, %v1096, %v918
      %v1105 = vsel %vm642, %v1097, %v920
      %v1106 = vsel %vm642, %v1098, %v922
      %v1107 = vsel %vm660, %v1099, %v933
      %v1108 = vsel %vm660, %v1100, %v935
      %v1109 = vsel %vm660, %v1101, %v937
      %v1110 = vsel %vm660, %v1102, %v939
      %v1111 = vsel %vm660, %v1103, %v941
      %v1112 = vsel %vm660, %v1104, %v943
      %v1113 = vsel %vm660, %v1105, %v945
      %v1114 = vsel %vm660, %v1106, %v947
      %v1115 = vsel %vm678, %v1107, %v961
      %v1116 = vsel %vm678, %v1108, %v963
      %v1117 = vsel %vm678, %v1109, %v965
      %v1118 = vsel %vm678, %v1110, %v967
      %v1119 = vsel %vm678, %v1111, %v969
      %v1120 = vsel %vm678, %v1112, %v971
      %v1121 = vsel %vm678, %v1113, %v973
      %v1122 = vsel %vm678, %v1114, %v975
      %vm1123 = vcmask 326656
      %v1124 = vsel %vm1123, %v1115, %v988
      %v1125 = vsel %vm1123, %v1116, %v990
      %v1126 = vsel %vm1123, %v1117, %v992
      %v1127 = vsel %vm1123, %v1118, %v994
      %v1128 = vsel %vm1123, %v1119, %v996
      %v1129 = vsel %vm1123, %v1120, %v998
      %v1130 = vsel %vm1123, %v1121, %v1000
      %v1131 = vsel %vm1123, %v1122, %v1002
      %vm1132 = vcmask 392192
      %v1133 = vsel %vm1132, %v1124, %v1013
      %v1134 = vsel %vm1132, %v1125, %v1015
      %v1135 = vsel %vm1132, %v1126, %v1017
      %v1136 = vsel %vm1132, %v1127, %v1019
      %v1137 = vsel %vm1132, %v1128, %v1021
      %v1138 = vsel %vm1132, %v1129, %v1023
      %v1139 = vsel %vm1132, %v1130, %v1025
      %v1140 = vsel %vm1132, %v1131, %v1027
      %vm1141 = vcmask 457728
      %v1142 = vsel %vm1141, %v1133, %v1041
      %v1143 = vsel %vm1141, %v1134, %v1043
      %v1144 = vsel %vm1141, %v1135, %v1045
      %v1145 = vsel %vm1141, %v1136, %v1047
      %v1146 = vsel %vm1141, %v1137, %v1049
      %v1147 = vsel %vm1141, %v1138, %v1051
      %v1148 = vsel %vm1141, %v1139, %v1053
      %v1149 = vsel %vm1141, %v1140, %v1055
      %vm1150 = vcmask 523264
      %v1151 = vsel %vm1150, %v1142, %v1068
      %v1152 = vsel %vm1150, %v1143, %v1070
      %v1153 = vsel %vm1150, %v1144, %v1072
      %v1154 = vsel %vm1150, %v1145, %v1074
      %v1155 = vsel %vm1150, %v1146, %v1076
      %v1156 = vsel %vm1150, %v1147, %v1078
      %v1157 = vsel %vm1150, %v1148, %v1080
      %v1158 = vsel %vm1150, %v1149, %v1082
      %v1159 = vpack.c.bf16 %v1152, %v1151
      %v1160 = vpack.c.bf16 %v1154, %v1153
      %v1161 = vpack.c.bf16 %v1156, %v1155
      %v1162 = vpack.c.bf16 %v1158, %v1157
      %v1163 = vld [vmem:[%s3] sm:$0xf]
      %v1164 = vld [vmem:[%s3 + $0x4] sm:$0xf]
      %v1165 = vld [vmem:[%s3 + $0x8] sm:$0xf]
      %v1166 = vld [vmem:[%s3 + $0xc] sm:$0xf]
      %v1167 = vld [vmem:[%s3 + $0x10] sm:$0xf]
      %v1168 = vld [vmem:[%s3 + $0x14] sm:$0xf]
      %v1169 = vld [vmem:[%s3 + $0x18] sm:$0xf]
      %v1170 = vld [vmem:[%s3 + $0x1c] sm:$0xf]
      %v1171 = vld [vmem:[%s3 + $0x20] sm:$0xf]
      %v1172 = vld [vmem:[%s4] sm:$0x1]
      %v1174 = vperm.slane %v1172, 0
      %v1185 = vunpack.c.l.b16 %v1163
      %v1186 = vunpack.c.l.b16 %v1164
      %v1187 = vunpack.c.l.b16 %v1165
      %v1188 = vunpack.c.l.b16 %v1166
      %v1189 = vunpack.c.l.b16 %v1167
      %v1190 = vunpack.c.l.b16 %v1168
      %v1191 = vunpack.c.l.b16 %v1169
      %v1192 = vunpack.c.l.b16 %v1170
      %v1193 = vunpack.c.l.b16 %v1171
      %v1194 = vpack.c.b16 %v1186, %v1185
      %v1195 = vpack.c.b16 %v1188, %v1187
      %v1196 = vpack.c.b16 %v1190, %v1189
      %v1197 = vpack.c.b16 %v1192, %v1191
      %v1198 = vpack.c.b16 %v1193, %v1193
      %vm1203 = vcmask 588800
      %v1205 = vsel %vm1203, %v1159, 0
      %v1208 = vsel %vm1203, %v1160, 0
      %v1211 = vsel %vm1203, %v1161, 0
      %v1214 = vsel %vm1203, %v1162, 0
      %vm1216 = vcmask 1043456
      %v1218 = vsel %vm1216, %v1198, 0
      %1220 = vmatpush.bf16.msra.mxu0 0
      %1221 = vmatpush.bf16.msra.mxu0 0
      %1222 = vmatpush.bf16.msra.mxu0 0
      %1223 = vmatpush.bf16.msra.mxu0 %v1218
      %1224 = vmatpush.bf16.msra.mxu0 %v1197
      %1225 = vmatpush.bf16.msra.mxu0 %v1196
      %1226 = vmatpush.bf16.msra.mxu0 %v1195
      %1227 = vmatpush.bf16.msra.mxu0 %v1194
      %1228 = vmatmul.bf16.gmra.mxu0 %v1205
      %v1229 = vpop.f32.mrf.mxu0
      %v1230 = vadd.f32 %v1174, %v1229
      %v1231 = vpop.f32.mrf.mxu0
      %v1232 = vadd.f32 %v1174, %v1231
      %1233 = vmatmul.bf16.gmra.mxu0 %v1208
      %v1234 = vpop.f32.mrf.mxu0
      %v1235 = vadd.f32 %v1174, %v1234
      %v1236 = vpop.f32.mrf.mxu0
      %v1237 = vadd.f32 %v1174, %v1236
      %1238 = vmatmul.bf16.gmra.mxu0 %v1211
      %v1239 = vpop.f32.mrf.mxu0
      %v1240 = vadd.f32 %v1174, %v1239
      %v1241 = vpop.f32.mrf.mxu0
      %v1242 = vadd.f32 %v1174, %v1241
      %1243 = vmatmul.bf16.gmra.mxu0 %v1214
      %v1244 = vpop.f32.mrf.mxu0
      %v1245 = vadd.f32 %v1174, %v1244
      %v1246 = vpop.f32.mrf.mxu0
      %v1247 = vadd.f32 %v1174, %v1246
      %1248 = vdwg.mxu0
      %v1249 = vmax.f32 %v1230, 0.0
      %v1250 = vmax.f32 %v1232, 0.0
      %v1251 = vmax.f32 %v1235, 0.0
      %v1252 = vmax.f32 %v1237, 0.0
      %v1253 = vmax.f32 %v1240, 0.0
      %v1254 = vmax.f32 %v1242, 0.0
      %v1255 = vmax.f32 %v1245, 0.0
      %v1256 = vmax.f32 %v1247, 0.0
      %1257 = vst.msk [vmem:[%s224] sm:$0xff] %vm624, %v1249
      %1258 = vst.msk [vmem:[%s224 + $0x8] sm:$0xff] %vm624, %v1250
      %1259 = vst.msk [vmem:[%s224 + $0x10] sm:$0xff] %vm624, %v1251
      %1260 = vst.msk [vmem:[%s224 + $0x18] sm:$0xff] %vm624, %v1252
      %1261 = vst.msk [vmem:[%s224 + $0x20] sm:$0xff] %vm624, %v1253
      %1262 = vst.msk [vmem:[%s224 + $0x28] sm:$0xff] %vm624, %v1254
      %1263 = vst.msk [vmem:[%s224 + $0x30] sm:$0xff] %vm624, %v1255
      %1264 = vst.msk [vmem:[%s224 + $0x38] sm:$0xff] %vm624, %v1256
      %p1265 = scmp.lt.s32.totalorder %s16, 1
      %s1266 = scalar_select %p1265, %s16, 1
      %s1267 = smul.addr %s1266, 8
      %s1268 = smul.addr %s1267, 8
      %s1269 = scalar_lea.vmem %s5, %s1268
      // Predicated region
      $region41: #{_lambda_.1} parent=39 // pred_check
        %p1270 = pneg %p144
      $region42: #{_lambda_.1} parent=39 // pred_check_branch
        %1272 = sbr.rel (%p1270) target = $region44
      $region43: #{_lambda_.1} parent=39 // pred_region
        _
      $region44: #{_lambda_.1} parent=39 // pred_fallthru
        _
    $region40: #{_lambda_.1} parent=5 // pred_fallthru
      _
    %p1273 = scmp.le.s32.totalorder 2, %s11
    // Predicated region
    $region45: #{_lambda_.1} parent=5 // pred_check
      %p1274 = pneg %p1273
    $region46: #{_lambda_.1} parent=5 // pred_check_branch
      %1276 = sbr.rel (%p1274) target = $region48
    $region47: #{_lambda_.1} parent=5 // pred_region
      %s1277 = ssub.s32 %s11, 2
      // Predicated region
      $region49: #{_lambda_.1} parent=47 // pred_check
        %p1278 = pneg %p150
      $region50: #{_lambda_.1} parent=47 // pred_check_branch
        %1280 = sbr.rel (%p1278) target = $region52
      $region51: #{_lambda_.1} parent=47 // pred_region
        %p1281 = scmp.lt.s32.totalorder %s17, 1
        %s1282 = scalar_select %p1281, %s17, 1
        %s1283 = smul.addr %s1282, 8
        %s1284 = smul.addr %s1283, 8
        %s1285 = scalar_lea.vmem %s5, %s1284
      $region52: #{_lambda_.1} parent=47 // pred_fallthru
        _
    $region48: #{_lambda_.1} parent=5 // pred_fallthru
      _
  $region6: #{_lambda_.1} parent=0 // loop_footer
    %s15 = sadd.s32 1, %s11
  $region7: #{_lambda_.1} parent=0 // loop_footer_branch
    %10 = sbr.rel target = $region3
  $region8: #{_lambda_.1} parent=0 // loop_exit
    _

</llo_original>
